<compile_context>
chip_gen: v7x
topology: tpu7x:2x2x1
jax: 0.10.0
libtpu: 0.0.40
codegen_flags: <defaults>
</compile_context>

<pallas_src>
import functools

import jax
import jax.numpy as jnp
from jax.experimental import pallas as pl
from jax.experimental.pallas import tpu as pltpu


def _round_up(x: int, m: int) -> int:
    return ((x + m - 1) // m) * m


def _fused_mlp_kernel(x_ref, *refs, hidden_dims):
    """Full MLP on a (tm, D_in) activation tile; writes a lane-dense (1, tm) tile.

    refs = (w_hidden_0, ..., w_hidden_{H-1}, w_last_row, b_all, o_ref)
      w_hidden_l : (d_l, d_{l+1})   bf16, resident in VMEM across grid steps
      w_last_row : (1, d_prev)      f32,  resident (final Linear -> 1)
      b_all      : (n_layers, 128)  f32,  resident, each bias starts at lane 0
    """
    n_hidden = len(hidden_dims)
    w_refs = refs[:n_hidden]
    w_last = refs[n_hidden][...]            # (1, d_prev) f32
    b_all = refs[n_hidden + 1][...]         # (n_layers, lane_pad) f32
    o_ref = refs[n_hidden + 2]              # (1, tm)

    h = x_ref[...]                          # (tm, d_in)
    for l in range(n_hidden):
        d_out = hidden_dims[l]
        w = w_refs[l][...]                  # bf16, resident
        # bf16 operands, f32 accumulation on the MXU.
        h = jnp.dot(h.astype(jnp.bfloat16), w,
                    preferred_element_type=jnp.float32)
        # bias (row-indexed, lane-0 aligned) + ReLU in f32 on the VPU.
        h = jnp.maximum(h + b_all[l, :d_out], 0.0)

    # Final Linear(d_prev -> 1): VPU multiply + lane reduce instead of an
    # almost-empty N=1 MXU push; result is written lane-dense as (1, tm).
    y = jnp.sum(h * w_last, axis=-1) + b_all[n_hidden, 0:1]   # (tm,)
    o_ref[...] = y[None, :].astype(o_ref.dtype)


def critic_forward(params, x, *, tm_max: int = 2048):
    """Forward pass of Critic as ONE fused Pallas kernel, tiled over batch.

    params: list of (w, b); w[l].shape = (d_l, d_{l+1}), last d_{L} must be 1.
    x: (B, D_in) activations.  Returns (B, 1) float32.
    """
    B, D_in = x.shape
    n_layers = len(params)
    dims = [D_in] + [w.shape[1] for (w, _) in params]
    d_out_last = dims[-1]
    if d_out_last != 1:
        # TODO(synk): a general last_layer_dim > 1 would need a (tm, d_out) MXU
        # output path; the Critic value head is always 1-wide.
        raise NotImplementedError("critic_forward assumes last_layer_dim == 1")
    hidden_dims = tuple(dims[1:-1])

    # ---- batch tile ---------------------------------------------------------
    # Large tiles amortize per-step overhead; for B > 128 keep the grid >= 2 so
    # v7x's two TensorCores both get work, and keep tm a multiple of 128 so the
    # lane-dense (1, tm) output block is legal and lane-aligned.
    if B > 128:
        tm = min(tm_max, _round_up(pl.cdiv(B, 2), 128))
    else:
        tm = _round_up(max(B, 1), 8)         # single step, near-full-array block
    num_steps = pl.cdiv(B, tm)               # ragged last tile handled by Pallas

    # ---- parameter packing --------------------------------------------------
    w_hidden = [w.astype(jnp.bfloat16) for (w, _) in params[:-1]]    # resident
    w_last = params[-1][0].reshape(1, -1).astype(jnp.float32)        # (1, d_prev)

    lane_pad = _round_up(max(dims[1:]), 128)

    def _pack_bias(b):
        b = b.reshape(1, -1).astype(jnp.float32)
        return jnp.pad(b, ((0, 0), (0, lane_pad - b.shape[1])))

    b_all = jnp.concatenate([_pack_bias(b) for (_, b) in params], axis=0)

    # ---- specs ---------------------------------------------------------------
    in_specs = [pl.BlockSpec((tm, D_in), lambda i: (i, 0))]           # streamed
    for w in w_hidden:
        in_specs.append(pl.BlockSpec(w.shape, lambda i: (0, 0)))      # resident
    in_specs.append(pl.BlockSpec(w_last.shape, lambda i: (0, 0)))     # resident
    in_specs.append(pl.BlockSpec(b_all.shape, lambda i: (0, 0)))      # resident

    out_specs = pl.BlockSpec((1, tm), lambda i: (0, i))               # lane-dense
    out_shape = jax.ShapeDtypeStruct((1, num_steps * tm), jnp.float32)

    flops = 2 * B * sum(dims[l] * dims[l + 1] for l in range(n_layers))
    bytes_accessed = (B * D_in * x.dtype.itemsize + B * 4
                      + sum(int(w.size) * 2 for w in w_hidden)
                      + int(w_last.size) * 4 + int(b_all.size) * 4)
    cost = pl.CostEstimate(flops=int(flops), transcendentals=0,
                           bytes_accessed=int(bytes_accessed))

    kernel = functools.partial(_fused_mlp_kernel, hidden_dims=hidden_dims)

    out = pl.pallas_call(
        kernel,
        out_shape=out_shape,
        grid=(num_steps,),
        in_specs=in_specs,
        out_specs=out_specs,
        compiler_params=pltpu.CompilerParams(
            dimension_semantics=("parallel",),   # lets v7x split batch over 2 TCs
        ),
        cost_estimate=cost,
    )(x, *w_hidden, w_last, b_all)

    # (1, steps*tm) -> (B, 1); rows >= B came from the ragged last tile.
    return out.reshape(-1, 1)[:B]


def init_critic_params(key, input_dim, hidden_layers, last_layer_dim):
    """Deterministic parameter init matching Critic's MLP layer shapes."""
    dims = [input_dim] + list(hidden_layers) + [last_layer_dim]
    params = []
    for i in range(len(dims) - 1):
        key, kw, kb = jax.random.split(key, 3)
        bound = 1.0 / jnp.sqrt(dims[i])
        w = jax.random.uniform(kw, (dims[i], dims[i + 1]),
                               minval=-bound, maxval=bound, dtype=jnp.float32)
        b = jax.random.uniform(kb, (dims[i + 1],),
                               minval=-bound, maxval=bound, dtype=jnp.float32)
        params.append((w, b))
    return params


def critic_forward_ref(params, x):
    """Plain-JAX (f32) reference for correctness checking."""
    n_layers = len(params)
    for i, (w, b) in enumerate(params):
        y = x @ w + b
        x = y if i == n_layers - 1 else jnp.maximum(y, 0.0)
    return x


if __name__ == "__main__":
    key = jax.random.PRNGKey(0)

    # Shapes consistent with the module: Critic(input_dim=32, [64, 64], 1)
    input_dim = 32
    hidden_layers = [64, 64]
    last_layer_dim = 1

    params = init_critic_params(key, input_dim, hidden_layers, last_layer_dim)

    # Tolerances are loosened vs. a pure-f32 reference because the hidden-layer
    # matmuls use bf16 operands (f32 accumulation).
    ATOL = 5e-2
    RTOL = 5e-2

    # Case 1: small batch (single grid step, near-full-array block).
    key, kx = jax.random.split(key)
    x_small = jax.random.normal(kx, (8, input_dim), dtype=jnp.float32)
    out_small = jax.block_until_ready(critic_forward(params, x_small))
    ref_small = critic_forward_ref(params, x_small)
    assert out_small.shape == (8, last_layer_dim)
    assert jnp.allclose(out_small, ref_small, atol=ATOL, rtol=RTOL), \
        "Pallas output mismatch (small batch)"

    # Case 2: larger, non-divisible batch (grid of 2, ragged last tile, no pad).
    key, kx2 = jax.random.split(key)
    x_big = jax.random.normal(kx2, (300, input_dim), dtype=jnp.float32)
    out_big = jax.block_until_ready(critic_forward(params, x_big))
    ref_big = critic_forward_ref(params, x_big)
    assert out_big.shape == (300, last_layer_dim)
    assert jnp.allclose(out_big, ref_big, atol=ATOL, rtol=RTOL), \
        "Pallas output mismatch (large batch)"

    print("KERNEL_OK")
</pallas_src>

<mosaic_0001>
module attributes {stable_mosaic.version = 11 : i64} {
  func.func @_fused_mlp_kernel(%arg0: i32, %arg1: memref<8x32xf32, #tpu.memory_space<vmem>>, %arg2: memref<32x64xbf16, #tpu.memory_space<vmem>>, %arg3: memref<64x64xbf16, #tpu.memory_space<vmem>>, %arg4: memref<1x64xf32, #tpu.memory_space<vmem>>, %arg5: memref<3x128xf32, #tpu.memory_space<vmem>>, %arg6: memref<1x8xf32, #tpu.memory_space<vmem>>) attributes {dimension_semantics = [#tpu.dimension_semantics<parallel>], iteration_bounds = array<i64: 1>, scalar_prefetch = 0 : i64, scratch_operands = 0 : i64, tpu.core_type = #tpu.core_type<tc>, window_params = [{transform_indices = @transform_0, window_bounds = array<i64: 8, 32>}, {pipeline_mode = #tpu.pipeline_mode<synchronous>, transform_indices = @transform_1, window_bounds = array<i64: 32, 64>}, {pipeline_mode = #tpu.pipeline_mode<synchronous>, transform_indices = @transform_2, window_bounds = array<i64: 64, 64>}, {pipeline_mode = #tpu.pipeline_mode<synchronous>, transform_indices = @transform_3, window_bounds = array<i64: 1, 64>}, {pipeline_mode = #tpu.pipeline_mode<synchronous>, transform_indices = @transform_4, window_bounds = array<i64: 3, 128>}, {transform_indices = @transform_5, window_bounds = array<i64: 1, 8>}]} {
    %c0 = arith.constant 0 : index
    %c0_0 = arith.constant 0 : index
    %0 = vector.load %arg4[%c0, %c0_0] : memref<1x64xf32, #tpu.memory_space<vmem>>, vector<1x64xf32>
    %c0_1 = arith.constant 0 : index
    %c0_2 = arith.constant 0 : index
    %1 = vector.load %arg5[%c0_1, %c0_2] : memref<3x128xf32, #tpu.memory_space<vmem>>, vector<3x128xf32>
    %c0_3 = arith.constant 0 : index
    %c0_4 = arith.constant 0 : index
    %2 = vector.load %arg1[%c0_3, %c0_4] : memref<8x32xf32, #tpu.memory_space<vmem>>, vector<8x32xf32>
    %c0_5 = arith.constant 0 : index
    %c0_6 = arith.constant 0 : index
    %3 = vector.load %arg2[%c0_5, %c0_6] : memref<32x64xbf16, #tpu.memory_space<vmem>>, vector<32x64xbf16>
    %4 = arith.truncf %2 : vector<8x32xf32> to vector<8x32xbf16>
    %cst = arith.constant dense<0.000000e+00> : vector<8x64xf32>
    %5 = tpu.matmul %4, %3, %cst {dimension_numbers = #tpu.dot_dimension_numbers<[1], [0], [0], [1], [0, 0, 1, 1], [], []>} : vector<8x32xbf16>, vector<32x64xbf16>, vector<8x64xf32> -> vector<8x64xf32>
    %6 = vector.extract_strided_slice %1 {offsets = [0, 0], sizes = [1, 64], strides = [1, 1]} : vector<3x128xf32> to vector<1x64xf32>
    %7 = vector.shape_cast %6 : vector<1x64xf32> to vector<64xf32>
    %8 = vector.shape_cast %7 : vector<64xf32> to vector<1x64xf32>
    %9 = vector.broadcast %8 : vector<1x64xf32> to vector<8x64xf32>
    %10 = arith.addf %5, %9 : vector<8x64xf32>
    %cst_7 = arith.constant 0.000000e+00 : f32
    %11 = vector.broadcast %cst_7 : f32 to vector<8x64xf32>
    %12 = arith.maximumf %10, %11 : vector<8x64xf32>
    %c0_8 = arith.constant 0 : index
    %c0_9 = arith.constant 0 : index
    %13 = vector.load %arg3[%c0_8, %c0_9] : memref<64x64xbf16, #tpu.memory_space<vmem>>, vector<64x64xbf16>
    %14 = arith.truncf %12 : vector<8x64xf32> to vector<8x64xbf16>
    %cst_10 = arith.constant dense<0.000000e+00> : vector<8x64xf32>
    %15 = tpu.matmul %14, %13, %cst_10 {dimension_numbers = #tpu.dot_dimension_numbers<[1], [0], [0], [1], [0, 0, 1, 1], [], []>} : vector<8x64xbf16>, vector<64x64xbf16>, vector<8x64xf32> -> vector<8x64xf32>
    %16 = vector.extract_strided_slice %1 {offsets = [1, 0], sizes = [1, 64], strides = [1, 1]} : vector<3x128xf32> to vector<1x64xf32>
    %17 = vector.shape_cast %16 : vector<1x64xf32> to vector<64xf32>
    %18 = vector.shape_cast %17 : vector<64xf32> to vector<1x64xf32>
    %19 = vector.broadcast %18 : vector<1x64xf32> to vector<8x64xf32>
    %20 = arith.addf %15, %19 : vector<8x64xf32>
    %cst_11 = arith.constant 0.000000e+00 : f32
    %21 = vector.broadcast %cst_11 : f32 to vector<8x64xf32>
    %22 = arith.maximumf %20, %21 : vector<8x64xf32>
    %23 = vector.broadcast %0 : vector<1x64xf32> to vector<8x64xf32>
    %24 = arith.mulf %22, %23 : vector<8x64xf32>
    %cst_12 = arith.constant dense<0.000000e+00> : vector<8xf32>
    %25 = vector.multi_reduction <add>, %24, %cst_12 [1] : vector<8x64xf32> to vector<8xf32>
    %26 = vector.extract_strided_slice %1 {offsets = [2, 0], sizes = [1, 1], strides = [1, 1]} : vector<3x128xf32> to vector<1x1xf32>
    %27 = vector.shape_cast %26 : vector<1x1xf32> to vector<1xf32>
    %28 = vector.broadcast %27 : vector<1xf32> to vector<8xf32>
    %29 = arith.addf %25, %28 : vector<8xf32>
    %30 = vector.shape_cast %29 : vector<8xf32> to vector<1x8xf32>
    %c0_13 = arith.constant 0 : index
    %c0_14 = arith.constant 0 : index
    %31 = vector.load %arg6[%c0_13, %c0_14] : memref<1x8xf32, #tpu.memory_space<vmem>>, vector<1x8xf32>
    tpu.vector_store %arg6[%c0_13, %c0_14], %30 {strides = array<i32>} : memref<1x8xf32, #tpu.memory_space<vmem>>, vector<1x8xf32>,
    return
  }
  func.func @transform_0(%arg0: i32) -> (i32, i32) {
    %c0_i32 = arith.constant 0 : i32
    %c0_i32_0 = arith.constant 0 : i32
    return %arg0, %c0_i32 : i32, i32
  }
  func.func @transform_1(%arg0: i32) -> (i32, i32) {
    %c0_i32 = arith.constant 0 : i32
    %c0_i32_0 = arith.constant 0 : i32
    %c0_i32_1 = arith.constant 0 : i32
    return %c0_i32, %c0_i32_0 : i32, i32
  }
  func.func @transform_2(%arg0: i32) -> (i32, i32) {
    %c0_i32 = arith.constant 0 : i32
    %c0_i32_0 = arith.constant 0 : i32
    %c0_i32_1 = arith.constant 0 : i32
    return %c0_i32, %c0_i32_0 : i32, i32
  }
  func.func @transform_3(%arg0: i32) -> (i32, i32) {
    %c0_i32 = arith.constant 0 : i32
    %c0_i32_0 = arith.constant 0 : i32
    %c0_i32_1 = arith.constant 0 : i32
    return %c0_i32, %c0_i32_0 : i32, i32
  }
  func.func @transform_4(%arg0: i32) -> (i32, i32) {
    %c0_i32 = arith.constant 0 : i32
    %c0_i32_0 = arith.constant 0 : i32
    %c0_i32_1 = arith.constant 0 : i32
    return %c0_i32, %c0_i32_0 : i32, i32
  }
  func.func @transform_5(%arg0: i32) -> (i32, i32) {
    %c0_i32 = arith.constant 0 : i32
    %c0_i32_0 = arith.constant 0 : i32
    return %c0_i32, %arg0 : i32, i32
  }
}

</mosaic_0001>

<llo_original>
// kernel: tpu_custom_call.1
$region0: #{tpu_custom_call.1}
  #allocation0 [shape = 'u32[]', space=smem, size = 0x4, offset = 0x4, fixed_abs, tag = 'smem constant byte address 0x4 - core index']
  #allocation1 [shape = 'u32[144,128]{1,0:T(1,128)}', space=vmem, size = 0x12000, scoped, tag = 'internal scratch']
  %s0 = inlined_call_operand.hbm [shape: f32[8,32], index: 0, kind: input, shape index: {}]
  %s1 = inlined_call_operand.hbm [shape: bf16[32,64], index: 1, kind: input, shape index: {}]
  %s2 = inlined_call_operand.hbm [shape: bf16[64,64], index: 2, kind: input, shape index: {}]
  %s3 = inlined_call_operand.vmem [shape: f32[1,64], index: 3, kind: input, shape index: {}]
  %s4 = inlined_call_operand.vmem [shape: f32[3,128], index: 4, kind: input, shape index: {}]
  %s5 = inlined_call_operand.hbm [shape: f32[1,8], index: 5, kind: output, shape index: {}]
  %s6 = sld [smem:[#allocation0]]
  $region42: #{tpu_custom_call.1} parent=0
    _
  %s8 = ssub.s32 1, %s6
  %s9 = scalar_select 0, %s8, %s6
  $region1: #{tpu_custom_call.1} parent=0
    #allocation2 [shape = 'u8[4096]{0}', space=vmem, size = 0x1000, scoped, tag = 'input window, operand 0, single buffered']
    #allocation3 [shape = 's32[1]{0}', space=sflag, size = 0x4, scoped, tag = 'scoped memory for tpu_custom_call.1']
    #allocation4 [shape = 's32[1]{0}', space=sflag, size = 0x4, scoped, tag = 'scoped memory for tpu_custom_call.1']
    #allocation5 [shape = 'u8[8192]{0}', space=vmem, size = 0x2000, scoped, tag = 'input window, operand 1, single buffered']
    #allocation6 [shape = 's32[1]{0}', space=sflag, size = 0x4, scoped, tag = 'scoped memory for tpu_custom_call.1']
    #allocation7 [shape = 'u8[16384]{0}', space=vmem, size = 0x4000, scoped, tag = 'input window, operand 2, single buffered']
    #allocation8 [shape = 'u8[512]{0}', space=vmem, size = 0x400, scoped, tag = 'output window, operand 0, single buffered']
    %10 = vsyncpa [#allocation3], 0
    %11 = vsyncpa [#allocation6], 0
    %12 = vsyncpa [#allocation4], 0
    // Predicated region
    $region2: #{tpu_custom_call.1} parent=1 // pred_check
      _
    $region3: #{tpu_custom_call.1} parent=1 // pred_check_branch
      %14 = sbr.rel (0) target = $region5
    $region4: #{tpu_custom_call.1} parent=1 // pred_region
      %s16 = ssub.s32 128, 128
      %17 = vsyncadd [#allocation3], %s16
      %s19 = sshll.u32 [#allocation2], 4
      %s20 = int_to_ptr.vmem [resolvable:$true] %s19
      %22 = dma.hbm_to_vmem [thread:$0]  %s0, 128, %s20, [#allocation3]
    $region5: #{tpu_custom_call.1} parent=1 // pred_fallthru
      _
    // Predicated region
    $region6: #{tpu_custom_call.1} parent=1 // pred_check
      _
    $region7: #{tpu_custom_call.1} parent=1 // pred_check_branch
      %24 = sbr.rel (0) target = $region9
    $region8: #{tpu_custom_call.1} parent=1 // pred_region
      %s26 = ssub.s32 256, 256
      %27 = vsyncadd [#allocation6], %s26
      %s28 = sshll.u32 [#allocation5], 4
      %s29 = int_to_ptr.vmem [resolvable:$true] %s28
      %34 = dma.hbm_to_vmem [thread:$0]  %s1, 256, %s29, [#allocation6], 64, 64, 4
    $region9: #{tpu_custom_call.1} parent=1 // pred_fallthru
      _
    // Predicated region
    $region10: #{tpu_custom_call.1} parent=1 // pred_check
      _
    $region11: #{tpu_custom_call.1} parent=1 // pred_check_branch
      %36 = sbr.rel (0) target = $region13
    $region12: #{tpu_custom_call.1} parent=1 // pred_region
      %s38 = ssub.s32 512, 512
      %39 = vsyncadd [#allocation6], %s38
      %s40 = sshll.u32 [#allocation7], 4
      %s41 = int_to_ptr.vmem [resolvable:$true] %s40
      %46 = dma.hbm_to_vmem [thread:$0]  %s2, 512, %s41, [#allocation6], 64, 64, 4
    $region13: #{tpu_custom_call.1} parent=1 // pred_fallthru
      _
    // Predicated region
    $region14: #{tpu_custom_call.1} parent=1 // pred_check
      _
    $region15: #{tpu_custom_call.1} parent=1 // pred_check_branch
      %48 = sbr.rel (0) target = $region17
    $region16: #{tpu_custom_call.1} parent=1 // pred_region
      _
    $region17: #{tpu_custom_call.1} parent=1 // pred_fallthru
      _
    // Predicated region
    $region18: #{tpu_custom_call.1} parent=1 // pred_check
      _
    $region19: #{tpu_custom_call.1} parent=1 // pred_check_branch
      %50 = sbr.rel (0) target = $region21
    $region20: #{tpu_custom_call.1} parent=1 // pred_region
      _
    $region21: #{tpu_custom_call.1} parent=1 // pred_fallthru
      _
    // Predicated region
    $region22: #{tpu_custom_call.1} parent=1 // pred_check
      _
    $region23: #{tpu_custom_call.1} parent=1 // pred_check_branch
      %52 = sbr.rel (0) target = $region25
    $region24: #{tpu_custom_call.1} parent=1 // pred_region
      %53 = dma.done [#allocation3], 128
    $region25: #{tpu_custom_call.1} parent=1 // pred_fallthru
      _
    // Predicated region
    $region26: #{tpu_custom_call.1} parent=1 // pred_check
      _
    $region27: #{tpu_custom_call.1} parent=1 // pred_check_branch
      %55 = sbr.rel (0) target = $region29
    $region28: #{tpu_custom_call.1} parent=1 // pred_region
      %56 = dma.done [#allocation6], 256
    $region29: #{tpu_custom_call.1} parent=1 // pred_fallthru
      _
    // Predicated region
    $region30: #{tpu_custom_call.1} parent=1 // pred_check
      _
    $region31: #{tpu_custom_call.1} parent=1 // pred_check_branch
      %58 = sbr.rel (0) target = $region33
    $region32: #{tpu_custom_call.1} parent=1 // pred_region
      %59 = dma.done [#allocation6], 512
    $region33: #{tpu_custom_call.1} parent=1 // pred_fallthru
      _
    %v61 = vld [vmem:[%s3] sm:$0x1]
    %v62 = vld [vmem:[%s4] sm:$0x7]
    %v63 = vld [vmem:[#allocation2] sm:$0xff]
    %v64 = vld [vmem:[#allocation5] sm:$0xf]
    %v65 = vld [vmem:[#allocation5 + $0x4] sm:$0xf]
    %v66 = vld [vmem:[#allocation5 + $0x8] sm:$0xf]
    %v67 = vld [vmem:[#allocation5 + $0xc] sm:$0xf]
    %v68 = vpack.c.bf16 %v63, %v63
    %v69 = vlaneseq
    %v70 = vshrl.u32 %v69, 7
    %v71 = vsub.s32 0, %v70
    %v72 = vrot.slane %v62, %v71
    %v77 = vunpack.c.l.b16 %v64
    %v78 = vunpack.c.l.b16 %v65
    %v79 = vunpack.c.l.b16 %v66
    %v80 = vunpack.c.l.b16 %v67
    %v81 = vpack.c.b16 %v78, %v77
    %v82 = vpack.c.b16 %v80, %v79
    %vm85 = vcmask 261120
    %v87 = vsel %vm85, %v68, 0
    %89 = vmatprep.subr.bf16.mxu0 0
    %90 = vmatpush1.bf16.msra.mxu0 %v81
    %91 = vmatprep.subr.bf16.mxu0 0
    %92 = vmatpush1.bf16.msra.mxu0 %v82
    %93 = vmatprep.subr.bf16.mxu0 0
    %94 = vmatpush1.bf16.msra.mxu0 0
    %95 = vmatprep.subr.bf16.mxu0 0
    %96 = vmatpush1.bf16.msra.mxu0 0
    %97 = vmatprep.subr.bf16.mxu0 0
    %98 = vmatpush1.bf16.msra.mxu0 0
    %99 = vmatprep.subr.bf16.mxu0 0
    %100 = vmatpush1.bf16.msra.mxu0 0
    %101 = vmatprep.subr.bf16.mxu0 0
    %102 = vmatpush1.bf16.msra.mxu0 0
    %103 = vmatprep.subr.bf16.mxu0 0
    %104 = vmatpush1.bf16.msra.mxu0 0
    %105 = vmatprep.subr.bf16.mxu0 0
    %106 = vmatpush1.bf16.msra.mxu0 0
    %107 = vmatprep.subr.bf16.mxu0 0
    %108 = vmatpush1.bf16.msra.mxu0 0
    %109 = vmatprep.subr.bf16.mxu0 0
    %110 = vmatpush1.bf16.msra.mxu0 0
    %111 = vmatprep.subr.bf16.mxu0 0
    %112 = vmatpush1.bf16.msra.mxu0 0
    %113 = vmatprep.subr.bf16.mxu0 0
    %114 = vmatpush1.bf16.msra.mxu0 0
    %115 = vmatprep.subr.bf16.mxu0 0
    %116 = vmatpush1.bf16.msra.mxu0 0
    %117 = vmatprep.subr.bf16.mxu0 0
    %118 = vmatpush1.bf16.msra.mxu0 0
    %119 = vmatprep.subr.bf16.mxu0 0
    %120 = vmatpush1.bf16.msra.mxu0 0
    %121 = vmatprep.mubr.bf16.mxu0 0
    %122 = vmatmul.mubr.bf16.gmra.mrb[0].mxu0 %v87
    %v123 = vpop.f32.mrb[0].mxu0
    %v124 = vadd.f32 %v72, %v123
    %v125 = vpop.f32.mrb[0].mxu0
    %v126 = vpop.f32.mrb[0].mxu0
    %v127 = vpop.f32.mrb[0].mxu0
    %128 = vdwg.mxu0
    %v129 = vmax.f32 %v124, 0.0
    %v130 = vld [vmem:[#allocation7] sm:$0xf]
    %v131 = vld [vmem:[#allocation7 + $0x4] sm:$0xf]
    %v132 = vld [vmem:[#allocation7 + $0x8] sm:$0xf]
    %v133 = vld [vmem:[#allocation7 + $0xc] sm:$0xf]
    %v134 = vld [vmem:[#allocation7 + $0x10] sm:$0xf]
    %v135 = vld [vmem:[#allocation7 + $0x14] sm:$0xf]
    %v136 = vld [vmem:[#allocation7 + $0x18] sm:$0xf]
    %v137 = vld [vmem:[#allocation7 + $0x1c] sm:$0xf]
    %v138 = vpack.c.bf16 %v129, %v129
    %v139 = vlaneseq
    %v140 = vshrl.u32 %v139, 7
    %v141 = vsub.s32 1, %v140
    %v142 = vrot.slane %v62, %v141
    %v151 = vunpack.c.l.b16 %v130
    %v152 = vunpack.c.l.b16 %v131
    %v153 = vunpack.c.l.b16 %v132
    %v154 = vunpack.c.l.b16 %v133
    %v155 = vunpack.c.l.b16 %v134
    %v156 = vunpack.c.l.b16 %v135
    %v157 = vunpack.c.l.b16 %v136
    %v158 = vunpack.c.l.b16 %v137
    %v159 = vpack.c.b16 %v152, %v151
    %v160 = vpack.c.b16 %v154, %v153
    %v161 = vpack.c.b16 %v156, %v155
    %v162 = vpack.c.b16 %v158, %v157
    %vm167 = vcmask 523264
    %v169 = vsel %vm167, %v138, 0
    %171 = vmatprep.subr.bf16.mxu0 0
    %172 = vmatpush1.bf16.msra.mxu0 %v159
    %173 = vmatprep.subr.bf16.mxu0 0
    %174 = vmatpush1.bf16.msra.mxu0 %v160
    %175 = vmatprep.subr.bf16.mxu0 0
    %176 = vmatpush1.bf16.msra.mxu0 %v161
    %177 = vmatprep.subr.bf16.mxu0 0
    %178 = vmatpush1.bf16.msra.mxu0 %v162
    %179 = vmatprep.subr.bf16.mxu0 0
    %180 = vmatpush1.bf16.msra.mxu0 0
    %181 = vmatprep.subr.bf16.mxu0 0
    %182 = vmatpush1.bf16.msra.mxu0 0
    %183 = vmatprep.subr.bf16.mxu0 0
    %184 = vmatpush1.bf16.msra.mxu0 0
    %185 = vmatprep.subr.bf16.mxu0 0
    %186 = vmatpush1.bf16.msra.mxu0 0
    %187 = vmatprep.subr.bf16.mxu0 0
    %188 = vmatpush1.bf16.msra.mxu0 0
    %189 = vmatprep.subr.bf16.mxu0 0
    %190 = vmatpush1.bf16.msra.mxu0 0
    %191 = vmatprep.subr.bf16.mxu0 0
    %192 = vmatpush1.bf16.msra.mxu0 0
    %193 = vmatprep.subr.bf16.mxu0 0
    %194 = vmatpush1.bf16.msra.mxu0 0
    %195 = vmatprep.subr.bf16.mxu0 0
    %196 = vmatpush1.bf16.msra.mxu0 0
    %197 = vmatprep.subr.bf16.mxu0 0
    %198 = vmatpush1.bf16.msra.mxu0 0
    %199 = vmatprep.subr.bf16.mxu0 0
    %200 = vmatpush1.bf16.msra.mxu0 0
    %201 = vmatprep.subr.bf16.mxu0 0
    %202 = vmatpush1.bf16.msra.mxu0 0
    %203 = vmatprep.mubr.bf16.mxu0 0
    %204 = vmatmul.mubr.bf16.gmra.mrb[0].mxu0 %v169
    %v205 = vpop.f32.mrb[0].mxu0
    %v206 = vadd.f32 %v142, %v205
    %v207 = vpop.f32.mrb[0].mxu0
    %v208 = vpop.f32.mrb[0].mxu0
    %v209 = vpop.f32.mrb[0].mxu0
    %210 = vdwg.mxu0
    %v211 = vmax.f32 %v206, 0.0
    %v213 = vlaneseq
    %v214 = vshrl.u32 %v213, 7
    %v215 = vsub.s32 0, %v214
    %v216 = vrot.slane %v61, %v215
    %v218 = vmul.f32 %v211, %v216
    %v219 = vsel %vm167, %v218, 0.0
    %220 = vadd.xlane.f32.xlu0 %v219
    %v221 = vpop.xlane.xlu0 %220
    %223 = vset.pattern.permute.xlu0 0
    %224 = vperm.xlu0 %223, %v62
    %v225 = vpop.permute.xlu0 %224
    %v226 = vlaneseq
    %v227 = vshrl.u32 %v226, 7
    %v228 = vsub.s32 2, %v227
    %v229 = vrot.slane %v225, %v228
    %v231 = vadd.f32 %v221, %v229
    %233 = vset.pattern.permute.xlu0 0
    %234 = vperm.xlu0 %233, %v231
    %v235 = vpop.permute.xlu0 %234
    %v236 = vlaneseq
    %v237 = vand.u32 %v236, 127
    %v238 = vlaneseq
    %v239 = vshrl.u32 %v238, 7
    %v240 = vsub.s32 %v237, %v239
    %v241 = vrot.slane %v235, %v240
    %vm243 = vcmask 57344
    %244 = vst.msk [vmem:[#allocation8] sm:$0x1] %vm243, %v241
    // Predicated region
    $region34: #{tpu_custom_call.1} parent=1 // pred_check
      _
    $region35: #{tpu_custom_call.1} parent=1 // pred_check_branch
      %246 = sbr.rel (0) target = $region37
    $region36: #{tpu_custom_call.1} parent=1 // pred_region
      %s248 = ssub.s32 16, 16
      %249 = vsyncadd [#allocation4], %s248
      %s251 = sshll.u32 [#allocation8], 4
      %s252 = int_to_ptr.vmem [resolvable:$true] %s251
      %254 = dma.vmem_to_hbm [thread:$0]  %s252, 16, %s5, [#allocation4]
    $region37: #{tpu_custom_call.1} parent=1 // pred_fallthru
      _
    // Predicated region
    $region38: #{tpu_custom_call.1} parent=1 // pred_check
      _
    $region39: #{tpu_custom_call.1} parent=1 // pred_check_branch
      %256 = sbr.rel (0) target = $region41
    $region40: #{tpu_custom_call.1} parent=1 // pred_region
      %257 = dma.done [#allocation4], 16
    $region41: #{tpu_custom_call.1} parent=1 // pred_fallthru
      _
    %258 = vsyncpa [#allocation3], 1
    %259 = vsyncpa [#allocation6], 1
    %260 = vsyncpa [#allocation4], 1

</llo_original>
